<compile_context>
chip_gen: v5e
topology: v5e:2x2
jax: 0.10.0
libtpu: 0.0.40
codegen_flags: <defaults>
</compile_context>

<pallas_src>
import functools

import jax
import jax.numpy as jnp
from jax import lax
from jax.experimental import pallas as pl
from jax.experimental.pallas import tpu as pltpu


def _choose_row_tile(n):
    for tm in (256, 128, 64, 32, 16, 8):
        if n % tm == 0:
            return tm
    return n  # tiny / odd N: single block covering the full array


def _ntxent_kernel(z_ref, zp_ref, out_ref, *, inv_temp):
    """One row block of the NT-Xent loss.

    z_ref  : (N, D)  full [z_i; z_j], VMEM-resident across the grid.
    zp_ref : (TM, D) partner rows for this row block (row block of [z_j; z_i]).
    out_ref: (1, 8, 128) per-block partial sum (broadcast-filled).
    """
    tm = zp_ref.shape[0]
    row0 = pl.multiple_of(pl.program_id(0) * tm, tm)

    z_full = z_ref[...]                        # (N, D) f32
    n = z_full.shape[0]
    zb = z_ref[pl.ds(row0, tm), :]             # (TM, D) rows of this block
    zs = zb * inv_temp                         # fold 1/T into the LHS operand
    zp = zp_ref[...]                           # (TM, D) partner rows

    # sim[r, j] = <z[row0 + r], z[j]> / T; contract both last dims so the MXU
    # gets the transposed-RHS form directly (no relayout of z).
    sim = lax.dot_general(
        zs, z_full,
        dimension_numbers=(((1,), (1,)), ((), ())),
        preferred_element_type=jnp.float32)    # (TM, N)

    # Mask the self-similarity (diagonal) exactly like the reference so the
    # row max / logsumexp are taken over j != i only (numerically safe).
    col = lax.broadcasted_iota(jnp.int32, (tm, n), 1)
    row = lax.broadcasted_iota(jnp.int32, (tm, n), 0) + row0
    sim = jnp.where(col == row, jnp.float32(-1e30), sim)

    # Positive logit: per-row dot with the partner row, O(TM*D) VPU work.
    pos = jnp.sum(zs * zp, axis=1, keepdims=True)     # (TM, 1)

    # Row-wise logsumexp over the masked similarities.
    m = jnp.max(sim, axis=1, keepdims=True)           # (TM, 1)
    s = jnp.sum(jnp.exp(sim - m), axis=1, keepdims=True)
    lse = m + jnp.log(s)                              # (TM, 1)

    partial = jnp.sum(lse - pos)                      # scalar for this block
    out_ref[...] = jnp.broadcast_to(partial, out_ref.shape)


def intra_f_to_f_loss(z_i, z_j, temperature):
    """Pallas TPU equivalent of Intra_f_to_f.forward(z_i, z_j)."""
    assert z_i.shape == z_j.shape and z_i.ndim == 2
    batch_size, d = z_i.shape
    n = 2 * batch_size

    z = jnp.concatenate([z_i, z_j], axis=0).astype(jnp.float32)    # (N, D)
    zp = jnp.concatenate([z_j, z_i], axis=0).astype(jnp.float32)   # partner rows

    tm = _choose_row_tile(n)
    num_blocks = n // tm

    kernel = functools.partial(_ntxent_kernel, inv_temp=1.0 / float(temperature))

    # VMEM budget: resident z + double-buffered partner block + sim temporaries.
    est = 4 * (2 * n * d + 4 * tm * d + 8 * tm * n + 4 * 8 * 128) + (2 << 20)
    vmem_limit = int(min(max(est, 8 << 20), 48 << 20))

    out = pl.pallas_call(
        kernel,
        out_shape=jax.ShapeDtypeStruct((num_blocks, 8, 128), jnp.float32),
        grid=(num_blocks,),
        in_specs=[
            pl.BlockSpec((n, d), lambda i: (0, 0)),    # full z, VMEM-resident
            pl.BlockSpec((tm, d), lambda i: (i, 0)),   # partner row block
        ],
        out_specs=pl.BlockSpec((1, 8, 128), lambda i: (i, 0, 0)),
        compiler_params=pltpu.CompilerParams(
            dimension_semantics=("parallel",),
            vmem_limit_bytes=vmem_limit,
        ),
    )(z, zp)

    # Each block broadcast-fills its (8, 128) tile with its scalar partial.
    return jnp.sum(out[:, 0, 0]) / jnp.float32(n)


def _reference_loss(z_i, z_j, temperature):
    # Pure-JAX reference mirroring the PyTorch module.
    b = z_i.shape[0]
    n = 2 * b
    z = jnp.concatenate([z_i, z_j], axis=0).astype(jnp.float32)
    sim = (z @ z.T) / temperature
    idx = jnp.arange(n)
    pos = sim[idx, (idx + b) % n]
    sim_off = jnp.where(jnp.eye(n, dtype=bool), jnp.float32(-1e30), sim)
    lse = jax.nn.logsumexp(sim_off, axis=1)
    return jnp.sum(lse - pos) / n


if __name__ == "__main__":
    key = jax.random.PRNGKey(0)
    temperature = 0.5

    # Small shape consistent with the module: batch=4, hidden=32.
    k1, k2 = jax.random.split(key)
    z_i = jax.random.normal(k1, (4, 32), dtype=jnp.float32)
    z_j = jax.random.normal(k2, (4, 32), dtype=jnp.float32)
    loss = intra_f_to_f_loss(z_i, z_j, temperature)
    jax.block_until_ready(loss)
    ref = _reference_loss(z_i, z_j, temperature)
    assert jnp.allclose(loss, ref, rtol=1e-5, atol=1e-4), (loss, ref)

    # Second check exercising the tiled (multi row-block) path: N=512, TM=256.
    k3, k4 = jax.random.split(k2)
    z_i2 = jax.random.normal(k3, (256, 64), dtype=jnp.float32)
    z_j2 = jax.random.normal(k4, (256, 64), dtype=jnp.float32)
    loss2 = intra_f_to_f_loss(z_i2, z_j2, temperature)
    jax.block_until_ready(loss2)
    ref2 = _reference_loss(z_i2, z_j2, temperature)
    assert jnp.allclose(loss2, ref2, rtol=1e-5, atol=1e-4), (loss2, ref2)

    print("KERNEL_OK")
</pallas_src>

<mosaic_0001>
module attributes {stable_mosaic.version = 11 : i64} {
  func.func @_ntxent_kernel(%arg0: i32, %arg1: memref<8x32xf32, #tpu.memory_space<vmem>>, %arg2: memref<8x32xf32, #tpu.memory_space<vmem>>, %arg3: memref<1x8x128xf32, #tpu.memory_space<vmem>>) attributes {dimension_semantics = [#tpu.dimension_semantics<parallel>], iteration_bounds = array<i64: 1>, scalar_prefetch = 0 : i64, scratch_operands = 0 : i64, tpu.core_type = #tpu.core_type<tc>, window_params = [{pipeline_mode = #tpu.pipeline_mode<synchronous>, transform_indices = @transform_0, window_bounds = array<i64: 8, 32>}, {transform_indices = @transform_1, window_bounds = array<i64: 8, 32>}, {transform_indices = @transform_2, window_bounds = array<i64: 1, 8, 128>}]} {
    %c8_i32 = arith.constant 8 : i32
    %0 = arith.muli %arg0, %c8_i32 : i32
    %1 = tpu.assume_multiple %0, 8 : i32
    %c0 = arith.constant 0 : index
    %c0_0 = arith.constant 0 : index
    %2 = vector.load %arg1[%c0, %c0_0] : memref<8x32xf32, #tpu.memory_space<vmem>>, vector<8x32xf32>
    %3 = arith.index_cast %1 : i32 to index
    %c0_1 = arith.constant 0 : index
    %4 = vector.load %arg1[%3, %c0_1] : memref<8x32xf32, #tpu.memory_space<vmem>>, vector<8x32xf32>
    %cst = arith.constant 2.000000e+00 : f32
    %5 = vector.broadcast %cst : f32 to vector<8x32xf32>
    %6 = arith.mulf %4, %5 : vector<8x32xf32>
    %c0_2 = arith.constant 0 : index
    %c0_3 = arith.constant 0 : index
    %7 = vector.load %arg2[%c0_2, %c0_3] : memref<8x32xf32, #tpu.memory_space<vmem>>, vector<8x32xf32>
    %cst_4 = arith.constant dense<0.000000e+00> : vector<8x8xf32>
    %8 = tpu.matmul %6, %2, %cst_4 {dimension_numbers = #tpu.dot_dimension_numbers<[1], [1], [0], [0], [0, 0, 1, 0], [], []>} : vector<8x32xf32>, vector<8x32xf32>, vector<8x8xf32> -> vector<8x8xf32>
    %9 = tpu.iota {dimensions = array<i32: 1>} : vector<8x8xi32>
    %10 = tpu.iota {dimensions = array<i32: 0>} : vector<8x8xi32>
    %11 = vector.broadcast %1 : i32 to vector<8x8xi32>
    %12 = arith.addi %10, %11 : vector<8x8xi32>
    %13 = arith.cmpi eq, %9, %12 : vector<8x8xi32>
    %cst_5 = arith.constant -1.000000e+30 : f32
    %14 = vector.broadcast %cst_5 : f32 to vector<8x8xf32>
    %15 = arith.select %13, %14, %8 : vector<8x8xi1>, vector<8x8xf32>
    %16 = arith.mulf %6, %7 : vector<8x32xf32>
    %cst_6 = arith.constant dense<0.000000e+00> : vector<8xf32>
    %17 = vector.multi_reduction <add>, %16, %cst_6 [1] : vector<8x32xf32> to vector<8xf32>
    %18 = vector.shape_cast %17 : vector<8xf32> to vector<8x1xf32>
    %cst_7 = arith.constant dense<0xFF800000> : vector<8xf32>
    %19 = vector.multi_reduction <maximumf>, %15, %cst_7 [1] : vector<8x8xf32> to vector<8xf32>
    %20 = vector.shape_cast %19 : vector<8xf32> to vector<8x1xf32>
    %21 = vector.broadcast %20 : vector<8x1xf32> to vector<8x8xf32>
    %22 = arith.subf %15, %21 : vector<8x8xf32>
    %23 = math.exp %22 : vector<8x8xf32>
    %cst_8 = arith.constant dense<0.000000e+00> : vector<8xf32>
    %24 = vector.multi_reduction <add>, %23, %cst_8 [1] : vector<8x8xf32> to vector<8xf32>
    %25 = vector.shape_cast %24 : vector<8xf32> to vector<8x1xf32>
    %26 = math.log %25 : vector<8x1xf32>
    %27 = arith.addf %20, %26 : vector<8x1xf32>
    %28 = arith.subf %27, %18 : vector<8x1xf32>
    %29 = vector.shape_cast %28 : vector<8x1xf32> to vector<1x8x1xf32>
    %cst_9 = arith.constant dense<0.000000e+00> : vector<1xf32>
    %30 = vector.multi_reduction <add>, %29, %cst_9 [1, 2] : vector<1x8x1xf32> to vector<1xf32>
    %31 = vector.shape_cast %30 : vector<1xf32> to vector<1x1x1xf32>
    %32 = vector.extract %31[0, 0, 0] : f32 from vector<1x1x1xf32>
    %33 = vector.broadcast %32 : f32 to vector<1x8x128xf32>
    %c0_10 = arith.constant 0 : index
    %c0_11 = arith.constant 0 : index
    %c0_12 = arith.constant 0 : index
    %34 = vector.load %arg3[%c0_10, %c0_11, %c0_12] : memref<1x8x128xf32, #tpu.memory_space<vmem>>, vector<1x8x128xf32>
    tpu.vector_store %arg3[%c0_10, %c0_11, %c0_12], %33 {strides = array<i32>} : memref<1x8x128xf32, #tpu.memory_space<vmem>>, vector<1x8x128xf32>,
    return
  }
  func.func @transform_0(%arg0: i32) -> (i32, i32) {
    %c0_i32 = arith.constant 0 : i32
    %c0_i32_0 = arith.constant 0 : i32
    %c0_i32_1 = arith.constant 0 : i32
    return %c0_i32, %c0_i32_0 : i32, i32
  }
  func.func @transform_1(%arg0: i32) -> (i32, i32) {
    %c0_i32 = arith.constant 0 : i32
    %c0_i32_0 = arith.constant 0 : i32
    return %arg0, %c0_i32 : i32, i32
  }
  func.func @transform_2(%arg0: i32) -> (i32, i32, i32) {
    %c0_i32 = arith.constant 0 : i32
    %c0_i32_0 = arith.constant 0 : i32
    %c0_i32_1 = arith.constant 0 : i32
    return %arg0, %c0_i32, %c0_i32_0 : i32, i32, i32
  }
}

</mosaic_0001>

<llo_original>
// kernel: tpu_custom_call.1
$region0: #{tpu_custom_call.1}
  #allocation0 [shape = 'u32[]', space=smem, size = 0x4, offset = 0x4, fixed_abs, tag = 'smem constant byte address 0x4 - core index']
  #allocation1 [shape = 'u32[72,128]{1,0:T(1,128)}', space=vmem, size = 0x9000, scoped, tag = 'internal scratch']
  %s0 = inlined_call_operand.hbm [shape: f32[8,32], index: 0, kind: input, shape index: {}]
  %s1 = inlined_call_operand.hbm [shape: f32[8,32], index: 1, kind: input, shape index: {}]
  %s2 = inlined_call_operand.hbm [shape: f32[1,8,128], index: 2, kind: output, shape index: {}]
  %s3 = sld [smem:[#allocation0]]
  $region26: #{tpu_custom_call.1} parent=0
    _
  %s5 = ssub.s32 1, %s3
  %s6 = scalar_select 0, %s5, %s3
  $region1: #{tpu_custom_call.1} parent=0
    #allocation2 [shape = 'u8[4096]{0}', space=vmem, size = 0x1000, scoped, tag = 'input window, operand 0, single buffered']
    #allocation3 [shape = 's32[1]{0}', space=sflag, size = 0x4, scoped, tag = 'scoped memory for tpu_custom_call.1']
    #allocation4 [shape = 's32[1]{0}', space=sflag, size = 0x4, scoped, tag = 'scoped memory for tpu_custom_call.1']
    #allocation5 [shape = 'u8[4096]{0}', space=vmem, size = 0x1000, scoped, tag = 'input window, operand 1, single buffered']
    #allocation6 [shape = 's32[1]{0}', space=sflag, size = 0x4, scoped, tag = 'scoped memory for tpu_custom_call.1']
    #allocation7 [shape = 'u8[4096]{0}', space=vmem, size = 0x1000, scoped, tag = 'output window, operand 0, single buffered']
    %7 = vsyncpa [#allocation3], 0
    %8 = vsyncpa [#allocation6], 0
    %9 = vsyncpa [#allocation4], 0
    // Predicated region
    $region2: #{tpu_custom_call.1} parent=1 // pred_check
      _
    $region3: #{tpu_custom_call.1} parent=1 // pred_check_branch
      %11 = sbr.rel (0) target = $region5
    $region4: #{tpu_custom_call.1} parent=1 // pred_region
      %13 = vsyncadd [#allocation3], 0
      %s15 = sshll.u32 %s0, 4
      %s16 = int_to_ptr.hbm [resolvable:$true] %s15
      %s17 = sshll.u32 [#allocation2], 4
      %s18 = int_to_ptr.vmem [resolvable:$true] %s17
      %20 = dma.hbm_to_vmem [thread:$0]  %s16, 128, %s18, [#allocation3]
    $region5: #{tpu_custom_call.1} parent=1 // pred_fallthru
      _
    // Predicated region
    $region6: #{tpu_custom_call.1} parent=1 // pred_check
      _
    $region7: #{tpu_custom_call.1} parent=1 // pred_check_branch
      %22 = sbr.rel (0) target = $region9
    $region8: #{tpu_custom_call.1} parent=1 // pred_region
      %24 = vsyncadd [#allocation6], 0
      %s26 = sshll.u32 %s1, 4
      %s27 = int_to_ptr.hbm [resolvable:$true] %s26
      %s28 = sshll.u32 [#allocation5], 4
      %s29 = int_to_ptr.vmem [resolvable:$true] %s28
      %31 = dma.hbm_to_vmem [thread:$0]  %s27, 128, %s29, [#allocation6]
    $region9: #{tpu_custom_call.1} parent=1 // pred_fallthru
      _
    // Predicated region
    $region10: #{tpu_custom_call.1} parent=1 // pred_check
      _
    $region11: #{tpu_custom_call.1} parent=1 // pred_check_branch
      %33 = sbr.rel (0) target = $region13
    $region12: #{tpu_custom_call.1} parent=1 // pred_region
      %35 = dma.done [#allocation3], 128
    $region13: #{tpu_custom_call.1} parent=1 // pred_fallthru
      _
    // Predicated region
    $region14: #{tpu_custom_call.1} parent=1 // pred_check
      _
    $region15: #{tpu_custom_call.1} parent=1 // pred_check_branch
      %37 = sbr.rel (0) target = $region17
    $region16: #{tpu_custom_call.1} parent=1 // pred_region
      %39 = dma.done [#allocation6], 128
    $region17: #{tpu_custom_call.1} parent=1 // pred_fallthru
      _
    %s40 = smul.u32 0, 8
    %v41 = vld [vmem:[#allocation2] sm:$0xff]
    %s42 = scalar_lea.vmem [#allocation2], %s40
    %v43 = vld [vmem:[%s42] sm:$0xff]
    %v44 = vmul.f32 %v43, 2.0
    %v45 = vld [vmem:[#allocation5] sm:$0xff]
    %vm46 = vcmask 261120
    %v48 = vsel %vm46, %v44, 0
    %v51 = vsel %vm46, %v41, 0
    %53 = vmatpush.xpose.msra.mxu0 0.0
    %54 = vmatpush.xpose.msra.mxu0 0.0
    %55 = vmatpush.xpose.msra.mxu0 0.0
    %56 = vmatpush.xpose.msra.mxu0 0.0
    %57 = vmatpush.xpose.msra.mxu0 0.0
    %58 = vmatpush.xpose.msra.mxu0 0.0
    %59 = vmatpush.xpose.msra.mxu0 0.0
    %60 = vmatpush.xpose.msra.mxu0 0.0
    %61 = vmatpush.xpose.msra.mxu0 0.0
    %62 = vmatpush.xpose.msra.mxu0 0.0
    %63 = vmatpush.xpose.msra.mxu0 0.0
    %64 = vmatpush.xpose.msra.mxu0 0.0
    %65 = vmatpush.xpose.msra.mxu0 0.0
    %66 = vmatpush.xpose.msra.mxu0 0.0
    %67 = vmatpush.xpose.msra.mxu0 0.0
    %68 = vmatpush.xpose.msra.mxu0 %v51
    %69 = vmatmul.f32.gmra.mxu0 %v48
    %v70 = vpop.f32.mrf.mxu0
    %v71 = vadd.f32 0.0, %v70
    %72 = vdwg.mxu0
    %v73 = vlaneseq
    %v74 = vand.u32 %v73, 127
    %v75 = vlaneseq
    %v76 = vshrl.u32 %v75, 7
    %v77 = vstv %s40
    %v78 = vadd.s32 %v76, %v77
    %vm79 = vcmp.eq.s32.totalorder %v74, %v78
    %v80 = vsel %vm79, -1e+30, %v71
    %v81 = vmul.f32 %v44, %v45
    %v82 = vsel %vm46, %v81, 0.0
    %83 = vadd.xlane.f32.xlu0 %v82
    %v84 = vpop.xlane.xlu0 %83
    %vm85 = vcmask 64512
    %v86 = vsel %vm85, %v80, -inf
    %87 = vmax.xlane.f32.xlu0 %v86
    %v88 = vpop.xlane.xlu0 %87
    %v89 = vsub.f32 %v80, %v88
    %v90 = vmul.f32 %v89, 1.442695
    %v91 = vpow.pop %v90
    %v92 = vsel %vm85, %v91, 0.0
    %93 = vadd.xlane.f32.xlu0 %v92
    %v94 = vpop.xlane.xlu0 %93
    %v95 = vlog2.pop %v94
    %v96 = vmul.f32 %v95, 0.6931472
    %v97 = vadd.f32 %v88, %v96
    %v98 = vsub.f32 %v97, %v84
    %vm99 = vcmask 7168
    %v100 = vsel %vm99, %v98, 0.0
    %101 = vadd.xlane.f32.xlu0 %v100
    %v102 = vpop.xlane.xlu0 %101
    %v103 = vrot.slane %v102, 4
    %v104 = vadd.f32 %v102, %v103
    %v105 = vrot.slane %v104, 2
    %v106 = vadd.f32 %v104, %v105
    %v107 = vrot.slane %v106, 1
    %v108 = vadd.f32 %v106, %v107
    %s109 = vtos %v108
    %v110 = vstv %s109
    %111 = vst [vmem:[#allocation7] sm:$0xff] %v110
    // Predicated region
    $region18: #{tpu_custom_call.1} parent=1 // pred_check
      _
    $region19: #{tpu_custom_call.1} parent=1 // pred_check_branch
      %113 = sbr.rel (0) target = $region21
    $region20: #{tpu_custom_call.1} parent=1 // pred_region
      %115 = vsyncadd [#allocation4], 0
      %s117 = sshll.u32 [#allocation7], 4
      %s118 = int_to_ptr.vmem [resolvable:$true] %s117
      %s119 = sshll.u32 %s2, 4
      %s120 = int_to_ptr.hbm [resolvable:$true] %s119
      %122 = dma.vmem_to_hbm [thread:$0]  %s118, 128, %s120, [#allocation4]
    $region21: #{tpu_custom_call.1} parent=1 // pred_fallthru
      _
    // Predicated region
    $region22: #{tpu_custom_call.1} parent=1 // pred_check
      _
    $region23: #{tpu_custom_call.1} parent=1 // pred_check_branch
      %124 = sbr.rel (0) target = $region25
    $region24: #{tpu_custom_call.1} parent=1 // pred_region
      %126 = dma.done [#allocation4], 128
    $region25: #{tpu_custom_call.1} parent=1 // pred_fallthru
      _
    %127 = vsyncpa [#allocation3], 1
    %128 = vsyncpa [#allocation6], 1
    %129 = vsyncpa [#allocation4], 1

</llo_original>
